<compile_context>
chip_gen: v5e
topology: v5e:2x2
jax: 0.10.0
libtpu: 0.0.40
codegen_flags: <defaults>
</compile_context>

<pallas_src>
import functools

import jax
import jax.numpy as jnp
from jax.experimental import pallas as pl
from jax.experimental.pallas import tpu as pltpu


def _round_up(x, m):
    return (x + m - 1) // m * m


def _mlp_kernel(x_ref,
                w0_ref, b0_ref,
                w1_ref, b1_ref,
                w2_ref, b2_ref,
                w3_ref, b3_ref,
                o_ref):
    """4-layer MLP (3 ReLUs) on one batch tile; weights are VMEM-resident."""
    cdt = w0_ref.dtype  # MXU operand dtype (bf16)

    h = x_ref[...].astype(cdt)                                # in-kernel f32->bf16 cast
    h = jnp.dot(h, w0_ref[...], preferred_element_type=jnp.float32) + b0_ref[...]
    h = jnp.maximum(h, 0.0).astype(cdt)                       # relu(outer fc1)

    h = jnp.dot(h, w1_ref[...], preferred_element_type=jnp.float32) + b1_ref[...]
    h = jnp.maximum(h, 0.0).astype(cdt)                       # relu(nested.fc1)

    h = jnp.dot(h, w2_ref[...], preferred_element_type=jnp.float32) + b2_ref[...]
    h = jnp.maximum(h, 0.0).astype(cdt)                       # relu(nested.fc2)

    y = jnp.dot(h, w3_ref[...], preferred_element_type=jnp.float32) + b3_ref[...]
    o_ref[...] = y.astype(o_ref.dtype)                        # nested.fc3 (no relu)


@functools.partial(jax.jit, static_argnames=("out_features", "block_b"))
def nested_test_module_forward(x, params, *, out_features, block_b=1024):
    """x: (B, input_features) f32; params: pre-transposed / padded weights."""
    B, in_f = x.shape
    out_w = params["w3"].shape[1]                # == out_features (unpadded)
    assert out_w == out_features

    # Batch tiling: sublane-aligned, and try to give the grid >=2 steps so the
    # "parallel" axis can shard across both TensorCores on v7x.
    b_pad = _round_up(max(B, 8), 8)
    tb = min(block_b, b_pad)
    if b_pad // tb < 2 and b_pad >= 16:
        tb = _round_up(pl.cdiv(b_pad, 2), 8)
    b_pad = _round_up(b_pad, tb)
    grid = (b_pad // tb,)

    # Pad only the batch dim (features stay at their true width); no dtype cast
    # in the wrapper -- the kernel casts to bf16 itself.
    x_in = x if b_pad == B else jnp.zeros((b_pad, in_f), x.dtype).at[:B, :].set(x)

    w0, b0 = params["w0"], params["b0"]
    w1, b1 = params["w1"], params["b1"]
    w2, b2 = params["w2"], params["b2"]
    w3, b3 = params["w3"], params["b3"]

    def resident(arr):  # full array, same block every step -> stays in VMEM
        return pl.BlockSpec(arr.shape, lambda i: (0,) * arr.ndim)

    weight_bytes = sum(v.size * v.dtype.itemsize for v in params.values())
    flops = 2 * b_pad * sum(
        params[f"w{i}"].shape[0] * params[f"w{i}"].shape[1] for i in range(4))
    bytes_accessed = (x_in.size * x_in.dtype.itemsize
                      + weight_bytes
                      + b_pad * out_features * 4)

    # VMEM budget: double-buffered I/O tiles + resident weights + intermediates,
    # with generous margin -- stays far below v7x's 64 MiB per-core VMEM.
    vmem_est = (2 * (tb * in_f * x_in.dtype.itemsize + tb * out_features * 4)
                + 2 * weight_bytes
                + 8 * tb * 128 * 4)
    vmem_limit = max(16 * 1024 * 1024, int(vmem_est * 3 // 2))

    out = pl.pallas_call(
        _mlp_kernel,
        out_shape=jax.ShapeDtypeStruct((b_pad, out_features), jnp.float32),
        grid=grid,
        in_specs=[
            pl.BlockSpec((tb, in_f), lambda i: (i, 0)),   # x tile (pipelined)
            resident(w0), resident(b0),
            resident(w1), resident(b1),
            resident(w2), resident(b2),
            resident(w3), resident(b3),
        ],
        out_specs=pl.BlockSpec((tb, out_features), lambda i: (i, 0)),
        compiler_params=pltpu.CompilerParams(
            dimension_semantics=("parallel",),
            vmem_limit_bytes=vmem_limit,
        ),
        cost_estimate=pl.CostEstimate(
            flops=flops, transcendentals=0, bytes_accessed=bytes_accessed),
    )(x_in, w0, b0, w1, b1, w2, b2, w3, b3)

    return out if b_pad == B else out[:B]


def init_params(key, input_features, output_features, compute_dtype=jnp.bfloat16):
    """Deterministic init matching the nn.Linear shapes.

    PyTorch Linear stores weight as (out, in); we transpose once and pad:
      * layer-0 K stays at the raw input width (x is not feature-padded),
      * each layer's N (and the next layer's K) is padded to 128,
      * the final layer's N stays at output_features so the HBM output write
        is as small as possible.
    Padding is zero (mathematically inert). Weights are cast to bf16 for the
    MXU; biases stay f32 (added to the f32 accumulator).
    """
    dims = [
        (input_features, input_features),   # outer fc1
        (100, input_features),              # nested.fc1
        (50, 100),                          # nested.fc2
        (output_features, 50),              # nested.fc3
    ]
    params = {}
    prev_n_pad = input_features             # K of layer 0 == raw x width
    for i, (out_f, in_f) in enumerate(dims):
        key, kw, kb = jax.random.split(key, 3)
        bound = 1.0 / (in_f ** 0.5)
        w = jax.random.uniform(kw, (out_f, in_f), jnp.float32, -bound, bound)
        b = jax.random.uniform(kb, (out_f,), jnp.float32, -bound, bound)
        k_pad = prev_n_pad
        n_pad = out_f if i == len(dims) - 1 else _round_up(out_f, 128)
        w_pad = jnp.zeros((k_pad, n_pad), jnp.float32).at[:in_f, :out_f].set(w.T)
        b_pad = jnp.zeros((1, n_pad), jnp.float32).at[0, :out_f].set(b)
        params[f"w{i}"] = w_pad.astype(compute_dtype)   # (K_pad, N_pad)
        params[f"b{i}"] = b_pad                         # (1, N_pad), f32
        prev_n_pad = n_pad
    return params


def reference_forward(x, params):
    """Plain-JAX reference mirroring the kernel's mixed precision exactly."""
    cdt = params["w0"].dtype
    h = x.astype(cdt)
    acc = None
    for i in range(4):
        acc = (jnp.dot(h, params[f"w{i}"], preferred_element_type=jnp.float32)
               + params[f"b{i}"])
        if i < 3:
            h = jnp.maximum(acc, 0.0).astype(cdt)
    return acc


if __name__ == "__main__":
    key = jax.random.PRNGKey(0)
    batch = 8
    input_features = 32
    output_features = 16

    key, kx = jax.random.split(key)
    x = jax.random.normal(kx, (batch, input_features), jnp.float32)
    params = init_params(key, input_features, output_features)

    out = nested_test_module_forward(x, params, out_features=output_features)
    out = jax.block_until_ready(out)

    ref = reference_forward(x, params)
    assert out.shape == (batch, output_features), out.shape
    max_err = float(jnp.max(jnp.abs(out - ref)))
    assert jnp.allclose(out, ref, atol=1e-2, rtol=1e-2), max_err

    print("KERNEL_OK")
</pallas_src>

<mosaic_0001>
module attributes {stable_mosaic.version = 11 : i64} {
  func.func @_mlp_kernel(%arg0: i32, %arg1: memref<8x32xf32, #tpu.memory_space<vmem>>, %arg2: memref<32x128xbf16, #tpu.memory_space<vmem>>, %arg3: memref<1x128xf32, #tpu.memory_space<vmem>>, %arg4: memref<128x128xbf16, #tpu.memory_space<vmem>>, %arg5: memref<1x128xf32, #tpu.memory_space<vmem>>, %arg6: memref<128x128xbf16, #tpu.memory_space<vmem>>, %arg7: memref<1x128xf32, #tpu.memory_space<vmem>>, %arg8: memref<128x16xbf16, #tpu.memory_space<vmem>>, %arg9: memref<1x16xf32, #tpu.memory_space<vmem>>, %arg10: memref<8x16xf32, #tpu.memory_space<vmem>>) attributes {dimension_semantics = [#tpu.dimension_semantics<parallel>], iteration_bounds = array<i64: 1>, scalar_prefetch = 0 : i64, scratch_operands = 0 : i64, tpu.core_type = #tpu.core_type<tc>, window_params = [{transform_indices = @transform_0, window_bounds = array<i64: 8, 32>}, {pipeline_mode = #tpu.pipeline_mode<synchronous>, transform_indices = @transform_1, window_bounds = array<i64: 32, 128>}, {pipeline_mode = #tpu.pipeline_mode<synchronous>, transform_indices = @transform_2, window_bounds = array<i64: 1, 128>}, {pipeline_mode = #tpu.pipeline_mode<synchronous>, transform_indices = @transform_3, window_bounds = array<i64: 128, 128>}, {pipeline_mode = #tpu.pipeline_mode<synchronous>, transform_indices = @transform_4, window_bounds = array<i64: 1, 128>}, {pipeline_mode = #tpu.pipeline_mode<synchronous>, transform_indices = @transform_5, window_bounds = array<i64: 128, 128>}, {pipeline_mode = #tpu.pipeline_mode<synchronous>, transform_indices = @transform_6, window_bounds = array<i64: 1, 128>}, {pipeline_mode = #tpu.pipeline_mode<synchronous>, transform_indices = @transform_7, window_bounds = array<i64: 128, 16>}, {pipeline_mode = #tpu.pipeline_mode<synchronous>, transform_indices = @transform_8, window_bounds = array<i64: 1, 16>}, {transform_indices = @transform_9, window_bounds = array<i64: 8, 16>}]} {
    %c0 = arith.constant 0 : index
    %c0_0 = arith.constant 0 : index
    %0 = vector.load %arg1[%c0, %c0_0] : memref<8x32xf32, #tpu.memory_space<vmem>>, vector<8x32xf32>
    %1 = arith.truncf %0 : vector<8x32xf32> to vector<8x32xbf16>
    %c0_1 = arith.constant 0 : index
    %c0_2 = arith.constant 0 : index
    %2 = vector.load %arg2[%c0_1, %c0_2] : memref<32x128xbf16, #tpu.memory_space<vmem>>, vector<32x128xbf16>
    %cst = arith.constant dense<0.000000e+00> : vector<8x128xf32>
    %3 = tpu.matmul %1, %2, %cst {dimension_numbers = #tpu.dot_dimension_numbers<[1], [0], [0], [1], [0, 0, 1, 1], [], []>} : vector<8x32xbf16>, vector<32x128xbf16>, vector<8x128xf32> -> vector<8x128xf32>
    %c0_3 = arith.constant 0 : index
    %c0_4 = arith.constant 0 : index
    %4 = vector.load %arg3[%c0_3, %c0_4] : memref<1x128xf32, #tpu.memory_space<vmem>>, vector<1x128xf32>
    %5 = vector.broadcast %4 : vector<1x128xf32> to vector<8x128xf32>
    %6 = arith.addf %3, %5 : vector<8x128xf32>
    %cst_5 = arith.constant 0.000000e+00 : f32
    %7 = vector.broadcast %cst_5 : f32 to vector<8x128xf32>
    %8 = arith.maximumf %6, %7 : vector<8x128xf32>
    %9 = arith.truncf %8 : vector<8x128xf32> to vector<8x128xbf16>
    %c0_6 = arith.constant 0 : index
    %c0_7 = arith.constant 0 : index
    %10 = vector.load %arg4[%c0_6, %c0_7] : memref<128x128xbf16, #tpu.memory_space<vmem>>, vector<128x128xbf16>
    %cst_8 = arith.constant dense<0.000000e+00> : vector<8x128xf32>
    %11 = tpu.matmul %9, %10, %cst_8 {dimension_numbers = #tpu.dot_dimension_numbers<[1], [0], [0], [1], [0, 0, 1, 1], [], []>} : vector<8x128xbf16>, vector<128x128xbf16>, vector<8x128xf32> -> vector<8x128xf32>
    %c0_9 = arith.constant 0 : index
    %c0_10 = arith.constant 0 : index
    %12 = vector.load %arg5[%c0_9, %c0_10] : memref<1x128xf32, #tpu.memory_space<vmem>>, vector<1x128xf32>
    %13 = vector.broadcast %12 : vector<1x128xf32> to vector<8x128xf32>
    %14 = arith.addf %11, %13 : vector<8x128xf32>
    %cst_11 = arith.constant 0.000000e+00 : f32
    %15 = vector.broadcast %cst_11 : f32 to vector<8x128xf32>
    %16 = arith.maximumf %14, %15 : vector<8x128xf32>
    %17 = arith.truncf %16 : vector<8x128xf32> to vector<8x128xbf16>
    %c0_12 = arith.constant 0 : index
    %c0_13 = arith.constant 0 : index
    %18 = vector.load %arg6[%c0_12, %c0_13] : memref<128x128xbf16, #tpu.memory_space<vmem>>, vector<128x128xbf16>
    %cst_14 = arith.constant dense<0.000000e+00> : vector<8x128xf32>
    %19 = tpu.matmul %17, %18, %cst_14 {dimension_numbers = #tpu.dot_dimension_numbers<[1], [0], [0], [1], [0, 0, 1, 1], [], []>} : vector<8x128xbf16>, vector<128x128xbf16>, vector<8x128xf32> -> vector<8x128xf32>
    %c0_15 = arith.constant 0 : index
    %c0_16 = arith.constant 0 : index
    %20 = vector.load %arg7[%c0_15, %c0_16] : memref<1x128xf32, #tpu.memory_space<vmem>>, vector<1x128xf32>
    %21 = vector.broadcast %20 : vector<1x128xf32> to vector<8x128xf32>
    %22 = arith.addf %19, %21 : vector<8x128xf32>
    %cst_17 = arith.constant 0.000000e+00 : f32
    %23 = vector.broadcast %cst_17 : f32 to vector<8x128xf32>
    %24 = arith.maximumf %22, %23 : vector<8x128xf32>
    %25 = arith.truncf %24 : vector<8x128xf32> to vector<8x128xbf16>
    %c0_18 = arith.constant 0 : index
    %c0_19 = arith.constant 0 : index
    %26 = vector.load %arg8[%c0_18, %c0_19] : memref<128x16xbf16, #tpu.memory_space<vmem>>, vector<128x16xbf16>
    %cst_20 = arith.constant dense<0.000000e+00> : vector<8x16xf32>
    %27 = tpu.matmul %25, %26, %cst_20 {dimension_numbers = #tpu.dot_dimension_numbers<[1], [0], [0], [1], [0, 0, 1, 1], [], []>} : vector<8x128xbf16>, vector<128x16xbf16>, vector<8x16xf32> -> vector<8x16xf32>
    %c0_21 = arith.constant 0 : index
    %c0_22 = arith.constant 0 : index
    %28 = vector.load %arg9[%c0_21, %c0_22] : memref<1x16xf32, #tpu.memory_space<vmem>>, vector<1x16xf32>
    %29 = vector.broadcast %28 : vector<1x16xf32> to vector<8x16xf32>
    %30 = arith.addf %27, %29 : vector<8x16xf32>
    %c0_23 = arith.constant 0 : index
    %c0_24 = arith.constant 0 : index
    %31 = vector.load %arg10[%c0_23, %c0_24] : memref<8x16xf32, #tpu.memory_space<vmem>>, vector<8x16xf32>
    tpu.vector_store %arg10[%c0_23, %c0_24], %30 {strides = array<i32>} : memref<8x16xf32, #tpu.memory_space<vmem>>, vector<8x16xf32>,
    return
  }
  func.func @transform_0(%arg0: i32) -> (i32, i32) {
    %c0_i32 = arith.constant 0 : i32
    %c0_i32_0 = arith.constant 0 : i32
    return %arg0, %c0_i32 : i32, i32
  }
  func.func @transform_1(%arg0: i32) -> (i32, i32) {
    %c0_i32 = arith.constant 0 : i32
    %c0_i32_0 = arith.constant 0 : i32
    %c0_i32_1 = arith.constant 0 : i32
    return %c0_i32, %c0_i32_0 : i32, i32
  }
  func.func @transform_2(%arg0: i32) -> (i32, i32) {
    %c0_i32 = arith.constant 0 : i32
    %c0_i32_0 = arith.constant 0 : i32
    %c0_i32_1 = arith.constant 0 : i32
    return %c0_i32, %c0_i32_0 : i32, i32
  }
  func.func @transform_3(%arg0: i32) -> (i32, i32) {
    %c0_i32 = arith.constant 0 : i32
    %c0_i32_0 = arith.constant 0 : i32
    %c0_i32_1 = arith.constant 0 : i32
    return %c0_i32, %c0_i32_0 : i32, i32
  }
  func.func @transform_4(%arg0: i32) -> (i32, i32) {
    %c0_i32 = arith.constant 0 : i32
    %c0_i32_0 = arith.constant 0 : i32
    %c0_i32_1 = arith.constant 0 : i32
    return %c0_i32, %c0_i32_0 : i32, i32
  }
  func.func @transform_5(%arg0: i32) -> (i32, i32) {
    %c0_i32 = arith.constant 0 : i32
    %c0_i32_0 = arith.constant 0 : i32
    %c0_i32_1 = arith.constant 0 : i32
    return %c0_i32, %c0_i32_0 : i32, i32
  }
  func.func @transform_6(%arg0: i32) -> (i32, i32) {
    %c0_i32 = arith.constant 0 : i32
    %c0_i32_0 = arith.constant 0 : i32
    %c0_i32_1 = arith.constant 0 : i32
    return %c0_i32, %c0_i32_0 : i32, i32
  }
  func.func @transform_7(%arg0: i32) -> (i32, i32) {
    %c0_i32 = arith.constant 0 : i32
    %c0_i32_0 = arith.constant 0 : i32
    %c0_i32_1 = arith.constant 0 : i32
    return %c0_i32, %c0_i32_0 : i32, i32
  }
  func.func @transform_8(%arg0: i32) -> (i32, i32) {
    %c0_i32 = arith.constant 0 : i32
    %c0_i32_0 = arith.constant 0 : i32
    %c0_i32_1 = arith.constant 0 : i32
    return %c0_i32, %c0_i32_0 : i32, i32
  }
  func.func @transform_9(%arg0: i32) -> (i32, i32) {
    %c0_i32 = arith.constant 0 : i32
    %c0_i32_0 = arith.constant 0 : i32
    return %arg0, %c0_i32 : i32, i32
  }
}

</mosaic_0001>

<llo_original>
// kernel: nested_test_module_forward.1
$region0: #{nested_test_module_forward.1}
  #allocation0 [shape = 'u32[]', space=smem, size = 0x4, offset = 0x4, fixed_abs, tag = 'smem constant byte address 0x4 - core index']
  #allocation1 [shape = 'u32[72,128]{1,0:T(1,128)}', space=vmem, size = 0x9000, scoped, tag = 'internal scratch']
  %s0 = inlined_call_operand.vmem [shape: f32[8,32], index: 0, kind: input, shape index: {}]
  %s1 = inlined_call_operand.hbm [shape: bf16[32,128], index: 1, kind: input, shape index: {}]
  %s2 = inlined_call_operand.vmem [shape: f32[1,128], index: 2, kind: input, shape index: {}]
  %s3 = inlined_call_operand.vmem [shape: bf16[128,128], index: 3, kind: input, shape index: {}]
  %s4 = inlined_call_operand.vmem [shape: f32[1,128], index: 4, kind: input, shape index: {}]
  %s5 = inlined_call_operand.hbm [shape: bf16[128,128], index: 5, kind: input, shape index: {}]
  %s6 = inlined_call_operand.vmem [shape: f32[1,128], index: 6, kind: input, shape index: {}]
  %s7 = inlined_call_operand.vmem [shape: bf16[128,16], index: 7, kind: input, shape index: {}]
  %s8 = inlined_call_operand.vmem [shape: f32[1,16], index: 8, kind: input, shape index: {}]
  %s9 = inlined_call_operand.hbm [shape: f32[8,16], index: 9, kind: output, shape index: {}]
  %s10 = sld [smem:[#allocation0]]
  $region54: #{nested_test_module_forward.1} parent=0
    _
  %s12 = ssub.s32 1, %s10
  %s13 = scalar_select 0, %s12, %s10
  $region1: #{nested_test_module_forward.1} parent=0
    #allocation2 [shape = 'u8[8192]{0}', space=vmem, size = 0x2000, scoped, tag = 'input window, operand 1, single buffered']
    #allocation3 [shape = 's32[1]{0}', space=sflag, size = 0x4, scoped, tag = 'scoped memory for nested_test_module_forward.1']
    #allocation4 [shape = 's32[1]{0}', space=sflag, size = 0x4, scoped, tag = 'scoped memory for nested_test_module_forward.1']
    #allocation5 [shape = 'u8[32768]{0}', space=vmem, size = 0x8000, scoped, tag = 'input window, operand 5, single buffered']
    #allocation6 [shape = 's32[1]{0}', space=sflag, size = 0x4, scoped, tag = 'scoped memory for nested_test_module_forward.1']
    #allocation7 [shape = 'u8[4096]{0}', space=vmem, size = 0x1000, scoped, tag = 'output window, operand 0, single buffered']
    %14 = vsyncpa [#allocation3], 0
    %15 = vsyncpa [#allocation6], 0
    %16 = vsyncpa [#allocation4], 0
    // Predicated region
    $region2: #{nested_test_module_forward.1} parent=1 // pred_check
      _
    $region3: #{nested_test_module_forward.1} parent=1 // pred_check_branch
      %18 = sbr.rel (0) target = $region5
    $region4: #{nested_test_module_forward.1} parent=1 // pred_region
      _
    $region5: #{nested_test_module_forward.1} parent=1 // pred_fallthru
      _
    // Predicated region
    $region6: #{nested_test_module_forward.1} parent=1 // pred_check
      _
    $region7: #{nested_test_module_forward.1} parent=1 // pred_check_branch
      %20 = sbr.rel (0) target = $region9
    $region8: #{nested_test_module_forward.1} parent=1 // pred_region
      %22 = vsyncadd [#allocation3], 0
      %s23 = sshll.u32 %s1, 4
      %s24 = int_to_ptr.hbm [resolvable:$true] %s23
      %s25 = sshll.u32 [#allocation2], 4
      %s26 = int_to_ptr.vmem [resolvable:$true] %s25
      %31 = dma.hbm_to_vmem [thread:$0]  %s24, 256, %s26, [#allocation3], 64, 64, 4
    $region9: #{nested_test_module_forward.1} parent=1 // pred_fallthru
      _
    // Predicated region
    $region10: #{nested_test_module_forward.1} parent=1 // pred_check
      _
    $region11: #{nested_test_module_forward.1} parent=1 // pred_check_branch
      %33 = sbr.rel (0) target = $region13
    $region12: #{nested_test_module_forward.1} parent=1 // pred_region
      _
    $region13: #{nested_test_module_forward.1} parent=1 // pred_fallthru
      _
    // Predicated region
    $region14: #{nested_test_module_forward.1} parent=1 // pred_check
      _
    $region15: #{nested_test_module_forward.1} parent=1 // pred_check_branch
      %35 = sbr.rel (0) target = $region17
    $region16: #{nested_test_module_forward.1} parent=1 // pred_region
      _
    $region17: #{nested_test_module_forward.1} parent=1 // pred_fallthru
      _
    // Predicated region
    $region18: #{nested_test_module_forward.1} parent=1 // pred_check
      _
    $region19: #{nested_test_module_forward.1} parent=1 // pred_check_branch
      %37 = sbr.rel (0) target = $region21
    $region20: #{nested_test_module_forward.1} parent=1 // pred_region
      _
    $region21: #{nested_test_module_forward.1} parent=1 // pred_fallthru
      _
    // Predicated region
    $region22: #{nested_test_module_forward.1} parent=1 // pred_check
      _
    $region23: #{nested_test_module_forward.1} parent=1 // pred_check_branch
      %39 = sbr.rel (0) target = $region25
    $region24: #{nested_test_module_forward.1} parent=1 // pred_region
      %41 = vsyncadd [#allocation6], 0
      %s42 = sshll.u32 %s5, 4
      %s43 = int_to_ptr.hbm [resolvable:$true] %s42
      %s44 = sshll.u32 [#allocation5], 4
      %s45 = int_to_ptr.vmem [resolvable:$true] %s44
      %50 = dma.hbm_to_vmem [thread:$0]  %s43, 1024, %s45, [#allocation6], 64, 64, 4
    $region25: #{nested_test_module_forward.1} parent=1 // pred_fallthru
      _
    // Predicated region
    $region26: #{nested_test_module_forward.1} parent=1 // pred_check
      _
    $region27: #{nested_test_module_forward.1} parent=1 // pred_check_branch
      %52 = sbr.rel (0) target = $region29
    $region28: #{nested_test_module_forward.1} parent=1 // pred_region
      _
    $region29: #{nested_test_module_forward.1} parent=1 // pred_fallthru
      _
    // Predicated region
    $region30: #{nested_test_module_forward.1} parent=1 // pred_check
      _
    $region31: #{nested_test_module_forward.1} parent=1 // pred_check_branch
      %54 = sbr.rel (0) target = $region33
    $region32: #{nested_test_module_forward.1} parent=1 // pred_region
      _
    $region33: #{nested_test_module_forward.1} parent=1 // pred_fallthru
      _
    // Predicated region
    $region34: #{nested_test_module_forward.1} parent=1 // pred_check
      _
    $region35: #{nested_test_module_forward.1} parent=1 // pred_check_branch
      %56 = sbr.rel (0) target = $region37
    $region36: #{nested_test_module_forward.1} parent=1 // pred_region
      _
    $region37: #{nested_test_module_forward.1} parent=1 // pred_fallthru
      _
    // Predicated region
    $region38: #{nested_test_module_forward.1} parent=1 // pred_check
      _
    $region39: #{nested_test_module_forward.1} parent=1 // pred_check_branch
      %58 = sbr.rel (0) target = $region41
    $region40: #{nested_test_module_forward.1} parent=1 // pred_region
      %60 = dma.done [#allocation3], 256
    $region41: #{nested_test_module_forward.1} parent=1 // pred_fallthru
      _
    // Predicated region
    $region42: #{nested_test_module_forward.1} parent=1 // pred_check
      _
    $region43: #{nested_test_module_forward.1} parent=1 // pred_check_branch
      %62 = sbr.rel (0) target = $region45
    $region44: #{nested_test_module_forward.1} parent=1 // pred_region
      %64 = dma.done [#allocation6], 1024
    $region45: #{nested_test_module_forward.1} parent=1 // pred_fallthru
      _
    %v66 = vld [vmem:[%s0] sm:$0xff]
    %v67 = vpack.c.bf16 %v66, %v66
    %v68 = vld [vmem:[#allocation2] sm:$0xf]
    %v69 = vld [vmem:[#allocation2 + $0x4] sm:$0xf]
    %v70 = vld [vmem:[#allocation2 + $0x8] sm:$0xf]
    %v71 = vld [vmem:[#allocation2 + $0xc] sm:$0xf]
    %v72 = vld [vmem:[%s2] sm:$0x1]
    %v74 = vperm.slane %v72, 0
    %v80 = vunpack.c.l.b16 %v68
    %v81 = vunpack.c.l.b16 %v69
    %v82 = vunpack.c.l.b16 %v70
    %v83 = vunpack.c.l.b16 %v71
    %v84 = vpack.c.b16 %v81, %v80
    %v85 = vpack.c.b16 %v83, %v82
    %vm88 = vcmask 261120
    %v90 = vsel %vm88, %v67, 0
    %92 = vmatpush.bf16.msra.mxu0 0
    %93 = vmatpush.bf16.msra.mxu0 0
    %94 = vmatpush.bf16.msra.mxu0 0
    %95 = vmatpush.bf16.msra.mxu0 0
    %96 = vmatpush.bf16.msra.mxu0 0
    %97 = vmatpush.bf16.msra.mxu0 0
    %98 = vmatpush.bf16.msra.mxu0 %v85
    %99 = vmatpush.bf16.msra.mxu0 %v84
    %100 = vmatmul.bf16.gmra.mxu0 %v90
    %v101 = vpop.f32.mrf.mxu0
    %v102 = vadd.f32 %v74, %v101
    %v103 = vpop.f32.mrf.mxu0
    %104 = vdwg.mxu0
    %v105 = vmax.f32 %v102, 0.0
    %v106 = vpack.c.bf16 %v105, %v105
    %v107 = vld [vmem:[%s3] sm:$0xf]
    %v108 = vld [vmem:[%s3 + $0x4] sm:$0xf]
    %v109 = vld [vmem:[%s3 + $0x8] sm:$0xf]
    %v110 = vld [vmem:[%s3 + $0xc] sm:$0xf]
    %v111 = vld [vmem:[%s3 + $0x10] sm:$0xf]
    %v112 = vld [vmem:[%s3 + $0x14] sm:$0xf]
    %v113 = vld [vmem:[%s3 + $0x18] sm:$0xf]
    %v114 = vld [vmem:[%s3 + $0x1c] sm:$0xf]
    %v115 = vld [vmem:[%s3 + $0x20] sm:$0xf]
    %v116 = vld [vmem:[%s3 + $0x24] sm:$0xf]
    %v117 = vld [vmem:[%s3 + $0x28] sm:$0xf]
    %v118 = vld [vmem:[%s3 + $0x2c] sm:$0xf]
    %v119 = vld [vmem:[%s3 + $0x30] sm:$0xf]
    %v120 = vld [vmem:[%s3 + $0x34] sm:$0xf]
    %v121 = vld [vmem:[%s3 + $0x38] sm:$0xf]
    %v122 = vld [vmem:[%s3 + $0x3c] sm:$0xf]
    %v123 = vld [vmem:[%s4] sm:$0x1]
    %v125 = vperm.slane %v123, 0
    %v143 = vunpack.c.l.b16 %v107
    %v144 = vunpack.c.l.b16 %v108
    %v145 = vunpack.c.l.b16 %v109
    %v146 = vunpack.c.l.b16 %v110
    %v147 = vunpack.c.l.b16 %v111
    %v148 = vunpack.c.l.b16 %v112
    %v149 = vunpack.c.l.b16 %v113
    %v150 = vunpack.c.l.b16 %v114
    %v151 = vunpack.c.l.b16 %v115
    %v152 = vunpack.c.l.b16 %v116
    %v153 = vunpack.c.l.b16 %v117
    %v154 = vunpack.c.l.b16 %v118
    %v155 = vunpack.c.l.b16 %v119
    %v156 = vunpack.c.l.b16 %v120
    %v157 = vunpack.c.l.b16 %v121
    %v158 = vunpack.c.l.b16 %v122
    %v159 = vpack.c.b16 %v144, %v143
    %v160 = vpack.c.b16 %v146, %v145
    %v161 = vpack.c.b16 %v148, %v147
    %v162 = vpack.c.b16 %v150, %v149
    %v163 = vpack.c.b16 %v152, %v151
    %v164 = vpack.c.b16 %v154, %v153
    %v165 = vpack.c.b16 %v156, %v155
    %v166 = vpack.c.b16 %v158, %v157
    %175 = vmatpush.bf16.msra.mxu0 %v166
    %176 = vmatpush.bf16.msra.mxu0 %v165
    %177 = vmatpush.bf16.msra.mxu0 %v164
    %178 = vmatpush.bf16.msra.mxu0 %v163
    %179 = vmatpush.bf16.msra.mxu0 %v162
    %180 = vmatpush.bf16.msra.mxu0 %v161
    %181 = vmatpush.bf16.msra.mxu0 %v160
    %182 = vmatpush.bf16.msra.mxu0 %v159
    %183 = vmatmul.bf16.gmra.mxu0 %v106
    %v184 = vpop.f32.mrf.mxu0
    %v185 = vadd.f32 %v125, %v184
    %v186 = vpop.f32.mrf.mxu0
    %187 = vdwg.mxu0
    %v188 = vmax.f32 %v185, 0.0
    %v189 = vpack.c.bf16 %v188, %v188
    %v190 = vld [vmem:[#allocation5] sm:$0xf]
    %v191 = vld [vmem:[#allocation5 + $0x4] sm:$0xf]
    %v192 = vld [vmem:[#allocation5 + $0x8] sm:$0xf]
    %v193 = vld [vmem:[#allocation5 + $0xc] sm:$0xf]
    %v194 = vld [vmem:[#allocation5 + $0x10] sm:$0xf]
    %v195 = vld [vmem:[#allocation5 + $0x14] sm:$0xf]
    %v196 = vld [vmem:[#allocation5 + $0x18] sm:$0xf]
    %v197 = vld [vmem:[#allocation5 + $0x1c] sm:$0xf]
    %v198 = vld [vmem:[#allocation5 + $0x20] sm:$0xf]
    %v199 = vld [vmem:[#allocation5 + $0x24] sm:$0xf]
    %v200 = vld [vmem:[#allocation5 + $0x28] sm:$0xf]
    %v201 = vld [vmem:[#allocation5 + $0x2c] sm:$0xf]
    %v202 = vld [vmem:[#allocation5 + $0x30] sm:$0xf]
    %v203 = vld [vmem:[#allocation5 + $0x34] sm:$0xf]
    %v204 = vld [vmem:[#allocation5 + $0x38] sm:$0xf]
    %v205 = vld [vmem:[#allocation5 + $0x3c] sm:$0xf]
    %v206 = vld [vmem:[%s6] sm:$0x1]
    %v208 = vperm.slane %v206, 0
    %v226 = vunpack.c.l.b16 %v190
    %v227 = vunpack.c.l.b16 %v191
    %v228 = vunpack.c.l.b16 %v192
    %v229 = vunpack.c.l.b16 %v193
    %v230 = vunpack.c.l.b16 %v194
    %v231 = vunpack.c.l.b16 %v195
    %v232 = vunpack.c.l.b16 %v196
    %v233 = vunpack.c.l.b16 %v197
    %v234 = vunpack.c.l.b16 %v198
    %v235 = vunpack.c.l.b16 %v199
    %v236 = vunpack.c.l.b16 %v200
    %v237 = vunpack.c.l.b16 %v201
    %v238 = vunpack.c.l.b16 %v202
    %v239 = vunpack.c.l.b16 %v203
    %v240 = vunpack.c.l.b16 %v204
    %v241 = vunpack.c.l.b16 %v205
    %v242 = vpack.c.b16 %v227, %v226
    %v243 = vpack.c.b16 %v229, %v228
    %v244 = vpack.c.b16 %v231, %v230
    %v245 = vpack.c.b16 %v233, %v232
    %v246 = vpack.c.b16 %v235, %v234
    %v247 = vpack.c.b16 %v237, %v236
    %v248 = vpack.c.b16 %v239, %v238
    %v249 = vpack.c.b16 %v241, %v240
    %258 = vmatpush.bf16.msra.mxu0 %v249
    %259 = vmatpush.bf16.msra.mxu0 %v248
    %260 = vmatpush.bf16.msra.mxu0 %v247
    %261 = vmatpush.bf16.msra.mxu0 %v246
    %262 = vmatpush.bf16.msra.mxu0 %v245
    %263 = vmatpush.bf16.msra.mxu0 %v244
    %264 = vmatpush.bf16.msra.mxu0 %v243
    %265 = vmatpush.bf16.msra.mxu0 %v242
    %266 = vmatmul.bf16.gmra.mxu0 %v189
    %v267 = vpop.f32.mrf.mxu0
    %v268 = vadd.f32 %v208, %v267
    %v269 = vpop.f32.mrf.mxu0
    %270 = vdwg.mxu0
    %v271 = vmax.f32 %v268, 0.0
    %v272 = vpack.c.bf16 %v271, %v271
    %v273 = vld [vmem:[%s7] sm:$0xf]
    %v274 = vld [vmem:[%s7 + $0x4] sm:$0xf]
    %v275 = vld [vmem:[%s7 + $0x8] sm:$0xf]
    %v276 = vld [vmem:[%s7 + $0xc] sm:$0xf]
    %v277 = vld [vmem:[%s7 + $0x10] sm:$0xf]
    %v278 = vld [vmem:[%s7 + $0x14] sm:$0xf]
    %v279 = vld [vmem:[%s7 + $0x18] sm:$0xf]
    %v280 = vld [vmem:[%s7 + $0x1c] sm:$0xf]
    %v281 = vld [vmem:[%s7 + $0x20] sm:$0xf]
    %v282 = vld [vmem:[%s7 + $0x24] sm:$0xf]
    %v283 = vld [vmem:[%s7 + $0x28] sm:$0xf]
    %v284 = vld [vmem:[%s7 + $0x2c] sm:$0xf]
    %v285 = vld [vmem:[%s7 + $0x30] sm:$0xf]
    %v286 = vld [vmem:[%s7 + $0x34] sm:$0xf]
    %v287 = vld [vmem:[%s7 + $0x38] sm:$0xf]
    %v288 = vld [vmem:[%s7 + $0x3c] sm:$0xf]
    %v289 = vld [vmem:[%s8] sm:$0x1]
    %v291 = vperm.slane %v289, 0
    %v309 = vunpack.c.l.b16 %v273
    %v310 = vunpack.c.l.b16 %v274
    %v311 = vunpack.c.l.b16 %v275
    %v312 = vunpack.c.l.b16 %v276
    %v313 = vunpack.c.l.b16 %v277
    %v314 = vunpack.c.l.b16 %v278
    %v315 = vunpack.c.l.b16 %v279
    %v316 = vunpack.c.l.b16 %v280
    %v317 = vunpack.c.l.b16 %v281
    %v318 = vunpack.c.l.b16 %v282
    %v319 = vunpack.c.l.b16 %v283
    %v320 = vunpack.c.l.b16 %v284
    %v321 = vunpack.c.l.b16 %v285
    %v322 = vunpack.c.l.b16 %v286
    %v323 = vunpack.c.l.b16 %v287
    %v324 = vunpack.c.l.b16 %v288
    %v325 = vpack.c.b16 %v310, %v309
    %v326 = vpack.c.b16 %v312, %v311
    %v327 = vpack.c.b16 %v314, %v313
    %v328 = vpack.c.b16 %v316, %v315
    %v329 = vpack.c.b16 %v318, %v317
    %v330 = vpack.c.b16 %v320, %v319
    %v331 = vpack.c.b16 %v322, %v321
    %v332 = vpack.c.b16 %v324, %v323
    %341 = vmatpush.bf16.msra.mxu0 %v332
    %342 = vmatpush.bf16.msra.mxu0 %v331
    %343 = vmatpush.bf16.msra.mxu0 %v330
    %344 = vmatpush.bf16.msra.mxu0 %v329
    %345 = vmatpush.bf16.msra.mxu0 %v328
    %346 = vmatpush.bf16.msra.mxu0 %v327
    %347 = vmatpush.bf16.msra.mxu0 %v326
    %348 = vmatpush.bf16.msra.mxu0 %v325
    %349 = vmatmul.bf16.gmra.mxu0 %v272
    %v350 = vpop.f32.mrf.mxu0
    %v351 = vadd.f32 %v291, %v350
    %v352 = vpop.f32.mrf.mxu0
    %353 = vdwg.mxu0
    %vm354 = vcmask 130048
    %355 = vst.msk [vmem:[#allocation7] sm:$0xff] %vm354, %v351
    // Predicated region
    $region46: #{nested_test_module_forward.1} parent=1 // pred_check
      _
    $region47: #{nested_test_module_forward.1} parent=1 // pred_check_branch
      %357 = sbr.rel (0) target = $region49
    $region48: #{nested_test_module_forward.1} parent=1 // pred_region
      %359 = vsyncadd [#allocation4], 0
      %s361 = sshll.u32 [#allocation7], 4
      %s362 = int_to_ptr.vmem [resolvable:$true] %s361
      %s363 = sshll.u32 %s9, 4
      %s364 = int_to_ptr.hbm [resolvable:$true] %s363
      %366 = dma.vmem_to_hbm [thread:$0]  %s362, 128, %s364, [#allocation4]
    $region49: #{nested_test_module_forward.1} parent=1 // pred_fallthru
      _
    // Predicated region
    $region50: #{nested_test_module_forward.1} parent=1 // pred_check
      _
    $region51: #{nested_test_module_forward.1} parent=1 // pred_check_branch
      %368 = sbr.rel (0) target = $region53
    $region52: #{nested_test_module_forward.1} parent=1 // pred_region
      %370 = dma.done [#allocation4], 128
    $region53: #{nested_test_module_forward.1} parent=1 // pred_fallthru
      _
    %371 = vsyncpa [#allocation3], 1
    %372 = vsyncpa [#allocation6], 1
    %373 = vsyncpa [#allocation4], 1

</llo_original>
